<compile_context>
chip_gen: v7x
topology: tpu7x:2x2x1
jax: 0.10.0
libtpu: 0.0.40
codegen_flags: <defaults>
</compile_context>

<pallas_src>
import jax
import jax.numpy as jnp
from jax.experimental import pallas as pl
from jax.experimental.pallas import tpu as pltpu


HIDDEN = 256


def _round_up(n, m):
    return ((n + m - 1) // m) * m


def _tile_plan(batch, tm_cap=1024, split_threshold=256):
    """Pick (row_tile, padded_batch) for the 1-D batch grid."""
    b8 = _round_up(batch, 8)
    if b8 <= split_threshold:
        # Small batch: one grid step; tile == padded batch, so the lane-dense
        # output block equals the full output extent (no 128-divisibility need).
        return b8, b8
    # Larger batch: >= 2 grid steps so v7x's second TensorCore gets work.
    # Lane-dense (nq, tm) output blocks require tm % 128 == 0.
    tm = min(tm_cap, _round_up((b8 + 1) // 2, 128))
    tm = max(128, (tm // 128) * 128)
    b_pad = _round_up(batch, tm)
    return tm, b_pad


def _soft_q_kernel(x_ref, a_ref, w1x_ref, w1a_ref, w2_ref, bw_ref, b3_ref, o_ref):
    nq = o_ref.shape[0]
    x16 = x_ref[...].astype(jnp.bfloat16)
    a16 = a_ref[...].astype(jnp.bfloat16)
    for k in range(nq):                       # static unroll over critics (1 or 2)
        bw = bw_ref[k]                        # (3, HIDDEN) f32: rows = b1, b2, w3
        # fc1 on the un-concatenated inputs (MXU, bf16 operands, f32 accumulate)
        h1 = (jnp.dot(x16, w1x_ref[k], preferred_element_type=jnp.float32)
              + jnp.dot(a16, w1a_ref[k], preferred_element_type=jnp.float32)
              + bw[0:1, :])
        h1 = jnp.maximum(h1, 0.0)             # ReLU in f32 on the VPU (v5e-safe)
        # fc2 (MXU, bf16 operands, f32 accumulate)
        h2 = jnp.dot(h1.astype(jnp.bfloat16), w2_ref[k],
                     preferred_element_type=jnp.float32) + bw[1:2, :]
        h2 = jnp.maximum(h2, 0.0)
        # fc3 (256 -> 1): VPU multiply + lane reduce instead of an N=1 MXU matmul.
        q = jnp.sum(h2 * bw[2:3, :], axis=-1) + b3_ref[k]          # (tm,)
        o_ref[k, :] = q.astype(o_ref.dtype)   # lane-dense row store


def _soft_q_pallas(x, a, stacked, *, tm_cap=1024):
    """x: (B, obs_dim) f32, a: (B, act_dim) f32 -> (nq, B) f32."""
    w1x, w1a, w2, bw, b3 = stacked
    nq, obs_dim, _ = w1x.shape
    act_dim = w1a.shape[1]
    B = x.shape[0]
    d_in = obs_dim + act_dim

    tm, b_pad = _tile_plan(B, tm_cap)
    if b_pad != B:
        pad = ((0, b_pad - B), (0, 0))
        x = jnp.pad(x, pad)
        a = jnp.pad(a, pad)
    grid = (b_pad // tm,)

    cost = pl.CostEstimate(
        flops=2 * nq * b_pad * (d_in * HIDDEN + HIDDEN * HIDDEN + HIDDEN),
        transcendentals=0,
        bytes_accessed=(w1x.size + w1a.size + w2.size) * 2          # bf16 weights
        + (bw.size + b3.size) * 4                                   # f32 params
        + b_pad * d_in * 4                                          # inputs
        + nq * b_pad * 4,                                           # output
    )

    out = pl.pallas_call(
        _soft_q_kernel,
        out_shape=jax.ShapeDtypeStruct((nq, b_pad), jnp.float32),
        grid=grid,
        in_specs=[
            pl.BlockSpec((tm, obs_dim), lambda i: (i, 0)),             # x rows
            pl.BlockSpec((tm, act_dim), lambda i: (i, 0)),             # a rows
            pl.BlockSpec((nq, obs_dim, HIDDEN), lambda i: (0, 0, 0)),  # w1_x bf16, resident
            pl.BlockSpec((nq, act_dim, HIDDEN), lambda i: (0, 0, 0)),  # w1_a bf16, resident
            pl.BlockSpec((nq, HIDDEN, HIDDEN), lambda i: (0, 0, 0)),   # w2   bf16, resident
            pl.BlockSpec((nq, 3, HIDDEN), lambda i: (0, 0, 0)),        # [b1; b2; w3] f32
            pl.BlockSpec(memory_space=pltpu.MemorySpace.SMEM),         # b3 (nq,) scalars
        ],
        out_specs=pl.BlockSpec((nq, tm), lambda i: (0, i)),            # lane-dense q rows
        compiler_params=pltpu.CompilerParams(
            dimension_semantics=("parallel",)),
        cost_estimate=cost,
    )(x, a, w1x, w1a, w2, bw, b3)
    return out[:, :B]


def _stack_params(param_sets):
    """Stack per-critic param tuples along a new leading critic axis."""
    return tuple(jnp.stack(leaves, axis=0) for leaves in zip(*param_sets))


def soft_q_forward(x, a, params, *, tm_cap=1024):
    """Single SoftQNetwork forward (matches the PyTorch module): (B, 1) f32."""
    q = _soft_q_pallas(x, a, _stack_params((params,)), tm_cap=tm_cap)   # (1, B)
    return q[0, :, None]


def soft_q_forward_twin(x, a, params_q1, params_q2, *, tm_cap=1024):
    """Fused SAC twin critics sharing one launch and the x/a tiles."""
    q = _soft_q_pallas(x, a, _stack_params((params_q1, params_q2)),
                       tm_cap=tm_cap)                                    # (2, B)
    return q[0, :, None], q[1, :, None]


def init_params(key, obs_dim, act_dim):
    """PyTorch-Linear-style uniform init; weights stored (in, out), fc1 split,
    b1/b2/w3 packed into one (3, HIDDEN) slab, b3 as a scalar."""
    ks = jax.random.split(key, 6)
    d_in = obs_dim + act_dim

    def linear(kw, kb, fan_in, fan_out):
        bound = 1.0 / jnp.sqrt(jnp.float32(fan_in))
        w = jax.random.uniform(kw, (fan_in, fan_out), jnp.float32, -bound, bound)
        b = jax.random.uniform(kb, (fan_out,), jnp.float32, -bound, bound)
        return w, b

    w1, b1 = linear(ks[0], ks[1], d_in, HIDDEN)
    w2, b2 = linear(ks[2], ks[3], HIDDEN, HIDDEN)
    w3, b3 = linear(ks[4], ks[5], HIDDEN, 1)

    bw = jnp.stack([b1, b2, w3[:, 0]], axis=0)          # (3, HIDDEN) f32
    return (
        w1[:obs_dim].astype(jnp.bfloat16),               # w1_x (obs_dim, 256) bf16
        w1[obs_dim:].astype(jnp.bfloat16),               # w1_a (act_dim, 256) bf16
        w2.astype(jnp.bfloat16),                          # w2   (256, 256) bf16
        bw,                                               # [b1; b2; w3] f32
        b3[0],                                            # b3 scalar f32
    )


def soft_q_reference(x, a, params, *, mixed=True):
    """Plain-JAX reference. mixed=True mirrors the kernel's bf16-MXU path;
    mixed=False is the pure-f32 PyTorch forward."""
    w1x, w1a, w2, bw, b3 = params
    b1, b2, w3 = bw[0:1], bw[1:2], bw[2:3]
    if mixed:
        h1 = (jnp.dot(x.astype(jnp.bfloat16), w1x, preferred_element_type=jnp.float32)
              + jnp.dot(a.astype(jnp.bfloat16), w1a, preferred_element_type=jnp.float32)
              + b1)
    else:
        h1 = x @ w1x.astype(jnp.float32) + a @ w1a.astype(jnp.float32) + b1
    h1 = jnp.maximum(h1, 0.0)
    if mixed:
        h2 = jnp.dot(h1.astype(jnp.bfloat16), w2, preferred_element_type=jnp.float32) + b2
    else:
        h2 = h1 @ w2.astype(jnp.float32) + b2
    h2 = jnp.maximum(h2, 0.0)
    return jnp.sum(h2 * w3, axis=-1, keepdims=True) + b3


if __name__ == "__main__":
    key = jax.random.PRNGKey(0)
    k_x, k_a, k_p1, k_p2 = jax.random.split(key, 4)

    batch, obs_dim, act_dim = 8, 8, 4
    x = jax.random.normal(k_x, (batch, obs_dim), jnp.float32)
    a = jax.random.normal(k_a, (batch, act_dim), jnp.float32)
    p1 = init_params(k_p1, obs_dim, act_dim)
    p2 = init_params(k_p2, obs_dim, act_dim)

    # Single critic (matches the PyTorch module), small batch / single grid step.
    q = jax.block_until_ready(soft_q_forward(x, a, p1))
    assert q.shape == (batch, 1)
    assert jnp.allclose(q, soft_q_reference(x, a, p1, mixed=True), atol=1e-2, rtol=1e-2)
    assert jnp.allclose(q, soft_q_reference(x, a, p1, mixed=False), atol=5e-2, rtol=5e-2)

    # Fused twin critics on a larger batch: exercises padding, the multi-step
    # batch grid (2 parallel steps -> both v7x TensorCores) and the 128-multiple
    # lane-dense output tile.
    batch2 = 300
    x2 = jax.random.normal(jax.random.PRNGKey(1), (batch2, obs_dim), jnp.float32)
    a2 = jax.random.normal(jax.random.PRNGKey(2), (batch2, act_dim), jnp.float32)
    q1, q2 = soft_q_forward_twin(x2, a2, p1, p2)
    jax.block_until_ready((q1, q2))
    assert q1.shape == (batch2, 1) and q2.shape == (batch2, 1)
    assert jnp.allclose(q1, soft_q_reference(x2, a2, p1, mixed=True), atol=1e-2, rtol=1e-2)
    assert jnp.allclose(q2, soft_q_reference(x2, a2, p2, mixed=True), atol=1e-2, rtol=1e-2)
    assert jnp.allclose(q1, soft_q_reference(x2, a2, p1, mixed=False), atol=5e-2, rtol=5e-2)

    print("KERNEL_OK")
</pallas_src>

<mosaic_0001>
module attributes {stable_mosaic.version = 11 : i64} {
  func.func @_soft_q_kernel(%arg0: i32, %arg1: memref<8x8xf32, #tpu.memory_space<vmem>>, %arg2: memref<8x4xf32, #tpu.memory_space<vmem>>, %arg3: memref<1x8x256xbf16, #tpu.memory_space<vmem>>, %arg4: memref<1x4x256xbf16, #tpu.memory_space<vmem>>, %arg5: memref<1x256x256xbf16, #tpu.memory_space<vmem>>, %arg6: memref<1x3x256xf32, #tpu.memory_space<vmem>>, %arg7: memref<1xf32, #tpu.memory_space<smem>>, %arg8: memref<1x8xf32, #tpu.memory_space<vmem>>) attributes {dimension_semantics = [#tpu.dimension_semantics<parallel>], iteration_bounds = array<i64: 1>, scalar_prefetch = 0 : i64, scratch_operands = 0 : i64, tpu.core_type = #tpu.core_type<tc>, window_params = [{transform_indices = @transform_0, window_bounds = array<i64: 8, 8>}, {transform_indices = @transform_1, window_bounds = array<i64: 8, 4>}, {pipeline_mode = #tpu.pipeline_mode<synchronous>, transform_indices = @transform_2, window_bounds = array<i64: 1, 8, 256>}, {pipeline_mode = #tpu.pipeline_mode<synchronous>, transform_indices = @transform_3, window_bounds = array<i64: 1, 4, 256>}, {pipeline_mode = #tpu.pipeline_mode<synchronous>, transform_indices = @transform_4, window_bounds = array<i64: 1, 256, 256>}, {pipeline_mode = #tpu.pipeline_mode<synchronous>, transform_indices = @transform_5, window_bounds = array<i64: 1, 3, 256>}, {transform_indices = @transform_6, window_bounds = array<i64: 1>}, {transform_indices = @transform_7, window_bounds = array<i64: 1, 8>}]} {
    %c0 = arith.constant 0 : index
    %c0_0 = arith.constant 0 : index
    %0 = vector.load %arg1[%c0, %c0_0] : memref<8x8xf32, #tpu.memory_space<vmem>>, vector<8x8xf32>
    %1 = arith.truncf %0 : vector<8x8xf32> to vector<8x8xbf16>
    %c0_1 = arith.constant 0 : index
    %c0_2 = arith.constant 0 : index
    %2 = vector.load %arg2[%c0_1, %c0_2] : memref<8x4xf32, #tpu.memory_space<vmem>>, vector<8x4xf32>
    %3 = arith.truncf %2 : vector<8x4xf32> to vector<8x4xbf16>
    %c0_3 = arith.constant 0 : index
    %c0_4 = arith.constant 0 : index
    %c0_5 = arith.constant 0 : index
    %4 = vector.load %arg6[%c0_3, %c0_4, %c0_5] : memref<1x3x256xf32, #tpu.memory_space<vmem>>, vector<1x3x256xf32>
    %5 = vector.shape_cast %4 : vector<1x3x256xf32> to vector<3x256xf32>
    %c0_6 = arith.constant 0 : index
    %c0_7 = arith.constant 0 : index
    %c0_8 = arith.constant 0 : index
    %6 = vector.load %arg3[%c0_6, %c0_7, %c0_8] : memref<1x8x256xbf16, #tpu.memory_space<vmem>>, vector<1x8x256xbf16>
    %7 = vector.shape_cast %6 : vector<1x8x256xbf16> to vector<8x256xbf16>
    %cst = arith.constant dense<0.000000e+00> : vector<8x256xf32>
    %8 = tpu.matmul %1, %7, %cst {dimension_numbers = #tpu.dot_dimension_numbers<[1], [0], [0], [1], [0, 0, 1, 1], [], []>} : vector<8x8xbf16>, vector<8x256xbf16>, vector<8x256xf32> -> vector<8x256xf32>
    %c0_9 = arith.constant 0 : index
    %c0_10 = arith.constant 0 : index
    %c0_11 = arith.constant 0 : index
    %9 = vector.load %arg4[%c0_9, %c0_10, %c0_11] : memref<1x4x256xbf16, #tpu.memory_space<vmem>>, vector<1x4x256xbf16>
    %10 = vector.shape_cast %9 : vector<1x4x256xbf16> to vector<4x256xbf16>
    %cst_12 = arith.constant dense<0.000000e+00> : vector<8x256xf32>
    %11 = tpu.matmul %3, %10, %cst_12 {dimension_numbers = #tpu.dot_dimension_numbers<[1], [0], [0], [1], [0, 0, 1, 1], [], []>} : vector<8x4xbf16>, vector<4x256xbf16>, vector<8x256xf32> -> vector<8x256xf32>
    %12 = arith.addf %8, %11 : vector<8x256xf32>
    %13 = vector.extract_strided_slice %5 {offsets = [0, 0], sizes = [1, 256], strides = [1, 1]} : vector<3x256xf32> to vector<1x256xf32>
    %14 = vector.broadcast %13 : vector<1x256xf32> to vector<8x256xf32>
    %15 = arith.addf %12, %14 : vector<8x256xf32>
    %cst_13 = arith.constant 0.000000e+00 : f32
    %16 = vector.broadcast %cst_13 : f32 to vector<8x256xf32>
    %17 = arith.maximumf %15, %16 : vector<8x256xf32>
    %18 = arith.truncf %17 : vector<8x256xf32> to vector<8x256xbf16>
    %c0_14 = arith.constant 0 : index
    %c0_15 = arith.constant 0 : index
    %c0_16 = arith.constant 0 : index
    %19 = vector.load %arg5[%c0_14, %c0_15, %c0_16] : memref<1x256x256xbf16, #tpu.memory_space<vmem>>, vector<1x256x256xbf16>
    %20 = vector.shape_cast %19 : vector<1x256x256xbf16> to vector<256x256xbf16>
    %cst_17 = arith.constant dense<0.000000e+00> : vector<8x256xf32>
    %21 = tpu.matmul %18, %20, %cst_17 {dimension_numbers = #tpu.dot_dimension_numbers<[1], [0], [0], [1], [0, 0, 1, 1], [], []>} : vector<8x256xbf16>, vector<256x256xbf16>, vector<8x256xf32> -> vector<8x256xf32>
    %22 = vector.extract_strided_slice %5 {offsets = [1, 0], sizes = [1, 256], strides = [1, 1]} : vector<3x256xf32> to vector<1x256xf32>
    %23 = vector.broadcast %22 : vector<1x256xf32> to vector<8x256xf32>
    %24 = arith.addf %21, %23 : vector<8x256xf32>
    %cst_18 = arith.constant 0.000000e+00 : f32
    %25 = vector.broadcast %cst_18 : f32 to vector<8x256xf32>
    %26 = arith.maximumf %24, %25 : vector<8x256xf32>
    %27 = vector.extract_strided_slice %5 {offsets = [2, 0], sizes = [1, 256], strides = [1, 1]} : vector<3x256xf32> to vector<1x256xf32>
    %28 = vector.broadcast %27 : vector<1x256xf32> to vector<8x256xf32>
    %29 = arith.mulf %26, %28 : vector<8x256xf32>
    %cst_19 = arith.constant dense<0.000000e+00> : vector<8xf32>
    %30 = vector.multi_reduction <add>, %29, %cst_19 [1] : vector<8x256xf32> to vector<8xf32>
    %c0_20 = arith.constant 0 : index
    %31 = memref.load %arg7[%c0_20] : memref<1xf32, #tpu.memory_space<smem>>
    %32 = vector.broadcast %31 : f32 to vector<8xf32>
    %33 = arith.addf %30, %32 : vector<8xf32>
    %c0_21 = arith.constant 0 : index
    %c0_22 = arith.constant 0 : index
    %34 = vector.load %arg8[%c0_21, %c0_22] : memref<1x8xf32, #tpu.memory_space<vmem>>, vector<1x8xf32>
    %35 = vector.shape_cast %34 : vector<1x8xf32> to vector<8xf32>
    %36 = vector.shape_cast %33 : vector<8xf32> to vector<1x8xf32>
    tpu.vector_store %arg8[%c0_21, %c0_22], %36 {strides = array<i32>} : memref<1x8xf32, #tpu.memory_space<vmem>>, vector<1x8xf32>,
    return
  }
  func.func @transform_0(%arg0: i32) -> (i32, i32) {
    %c0_i32 = arith.constant 0 : i32
    %c0_i32_0 = arith.constant 0 : i32
    return %arg0, %c0_i32 : i32, i32
  }
  func.func @transform_1(%arg0: i32) -> (i32, i32) {
    %c0_i32 = arith.constant 0 : i32
    %c0_i32_0 = arith.constant 0 : i32
    return %arg0, %c0_i32 : i32, i32
  }
  func.func @transform_2(%arg0: i32) -> (i32, i32, i32) {
    %c0_i32 = arith.constant 0 : i32
    %c0_i32_0 = arith.constant 0 : i32
    %c0_i32_1 = arith.constant 0 : i32
    %c0_i32_2 = arith.constant 0 : i32
    return %c0_i32, %c0_i32_0, %c0_i32_1 : i32, i32, i32
  }
  func.func @transform_3(%arg0: i32) -> (i32, i32, i32) {
    %c0_i32 = arith.constant 0 : i32
    %c0_i32_0 = arith.constant 0 : i32
    %c0_i32_1 = arith.constant 0 : i32
    %c0_i32_2 = arith.constant 0 : i32
    return %c0_i32, %c0_i32_0, %c0_i32_1 : i32, i32, i32
  }
  func.func @transform_4(%arg0: i32) -> (i32, i32, i32) {
    %c0_i32 = arith.constant 0 : i32
    %c0_i32_0 = arith.constant 0 : i32
    %c0_i32_1 = arith.constant 0 : i32
    %c0_i32_2 = arith.constant 0 : i32
    return %c0_i32, %c0_i32_0, %c0_i32_1 : i32, i32, i32
  }
  func.func @transform_5(%arg0: i32) -> (i32, i32, i32) {
    %c0_i32 = arith.constant 0 : i32
    %c0_i32_0 = arith.constant 0 : i32
    %c0_i32_1 = arith.constant 0 : i32
    %c0_i32_2 = arith.constant 0 : i32
    return %c0_i32, %c0_i32_0, %c0_i32_1 : i32, i32, i32
  }
  func.func @transform_6(%arg0: i32) -> i32 {
    %c0_i32 = arith.constant 0 : i32
    %c0_i32_0 = arith.constant 0 : i32
    return %c0_i32 : i32
  }
  func.func @transform_7(%arg0: i32) -> (i32, i32) {
    %c0_i32 = arith.constant 0 : i32
    %c0_i32_0 = arith.constant 0 : i32
    return %c0_i32, %arg0 : i32, i32
  }
}

</mosaic_0001>

<llo_original>
// kernel: tpu_custom_call.1
$region0: #{tpu_custom_call.1}
  #allocation0 [shape = 'u32[]', space=smem, size = 0x4, offset = 0x4, fixed_abs, tag = 'smem constant byte address 0x4 - core index']
  #allocation1 [shape = 'u32[144,128]{1,0:T(1,128)}', space=vmem, size = 0x12000, scoped, tag = 'internal scratch']
  #allocation2 [shape = 'f32[1]{0:T(128)S(6)}', space=smem, size = 0x200, scoped, tag = 'scoped memory for tpu_custom_call.1']
  %s0 = inlined_call_operand.vmem [shape: f32[8,8], index: 0, kind: input, shape index: {}]
  %s1 = inlined_call_operand.vmem [shape: f32[8,4], index: 1, kind: input, shape index: {}]
  %s2 = inlined_call_operand.vmem [shape: bf16[1,8,256], index: 2, kind: input, shape index: {}]
  %s3 = inlined_call_operand.vmem [shape: bf16[1,4,256], index: 3, kind: input, shape index: {}]
  %s4 = inlined_call_operand.hbm [shape: bf16[1,256,256], index: 4, kind: input, shape index: {}]
  %s5 = inlined_call_operand.vmem [shape: f32[1,3,256], index: 5, kind: input, shape index: {}]
  %s6 = inlined_call_operand.<no memory space> [shape: f32[1], index: 6, kind: input, shape index: {}]
  %s7 = inlined_call_operand.hbm [shape: f32[1,8], index: 7, kind: output, shape index: {}]
  %s8 = sld [smem:[#allocation0]]
  $region42: #{tpu_custom_call.1} parent=0
    _
  %s10 = ssub.s32 1, %s8
  %s11 = scalar_select 0, %s10, %s8
  %12 = sst [smem:[#allocation2]] %s6
  $region1: #{tpu_custom_call.1} parent=0
    #allocation3 [shape = 'u8[131072]{0}', space=vmem, size = 0x20000, scoped, tag = 'input window, operand 4, single buffered']
    #allocation4 [shape = 's32[1]{0}', space=sflag, size = 0x4, scoped, tag = 'scoped memory for tpu_custom_call.1']
    #allocation5 [shape = 's32[1]{0}', space=sflag, size = 0x4, scoped, tag = 'scoped memory for tpu_custom_call.1']
    #allocation6 [shape = 'u8[512]{0}', space=vmem, size = 0x400, scoped, tag = 'output window, operand 0, single buffered']
    %13 = vsyncpa [#allocation4], 0
    %14 = vsyncpa [#allocation5], 0
    // Predicated region
    $region2: #{tpu_custom_call.1} parent=1 // pred_check
      _
    $region3: #{tpu_custom_call.1} parent=1 // pred_check_branch
      %16 = sbr.rel (0) target = $region5
    $region4: #{tpu_custom_call.1} parent=1 // pred_region
      _
    $region5: #{tpu_custom_call.1} parent=1 // pred_fallthru
      _
    // Predicated region
    $region6: #{tpu_custom_call.1} parent=1 // pred_check
      _
    $region7: #{tpu_custom_call.1} parent=1 // pred_check_branch
      %18 = sbr.rel (0) target = $region9
    $region8: #{tpu_custom_call.1} parent=1 // pred_region
      _
    $region9: #{tpu_custom_call.1} parent=1 // pred_fallthru
      _
    // Predicated region
    $region10: #{tpu_custom_call.1} parent=1 // pred_check
      _
    $region11: #{tpu_custom_call.1} parent=1 // pred_check_branch
      %20 = sbr.rel (0) target = $region13
    $region12: #{tpu_custom_call.1} parent=1 // pred_region
      _
    $region13: #{tpu_custom_call.1} parent=1 // pred_fallthru
      _
    // Predicated region
    $region14: #{tpu_custom_call.1} parent=1 // pred_check
      _
    $region15: #{tpu_custom_call.1} parent=1 // pred_check_branch
      %22 = sbr.rel (0) target = $region17
    $region16: #{tpu_custom_call.1} parent=1 // pred_region
      _
    $region17: #{tpu_custom_call.1} parent=1 // pred_fallthru
      _
    // Predicated region
    $region18: #{tpu_custom_call.1} parent=1 // pred_check
      _
    $region19: #{tpu_custom_call.1} parent=1 // pred_check_branch
      %24 = sbr.rel (0) target = $region21
    $region20: #{tpu_custom_call.1} parent=1 // pred_region
      %s26 = ssub.s32 4096, 4096
      %27 = vsyncadd [#allocation4], %s26
      %s28 = sshll.u32 [#allocation3], 4
      %s29 = int_to_ptr.vmem [resolvable:$true] %s28
      %34 = dma.hbm_to_vmem [thread:$0]  %s4, 4096, %s29, [#allocation4], 128, 128, 8
    $region21: #{tpu_custom_call.1} parent=1 // pred_fallthru
      _
    // Predicated region
    $region22: #{tpu_custom_call.1} parent=1 // pred_check
      _
    $region23: #{tpu_custom_call.1} parent=1 // pred_check_branch
      %36 = sbr.rel (0) target = $region25
    $region24: #{tpu_custom_call.1} parent=1 // pred_region
      _
    $region25: #{tpu_custom_call.1} parent=1 // pred_fallthru
      _
    // Predicated region
    $region26: #{tpu_custom_call.1} parent=1 // pred_check
      _
    $region27: #{tpu_custom_call.1} parent=1 // pred_check_branch
      %38 = sbr.rel (0) target = $region29
    $region28: #{tpu_custom_call.1} parent=1 // pred_region
      _
    $region29: #{tpu_custom_call.1} parent=1 // pred_fallthru
      _
    // Predicated region
    $region30: #{tpu_custom_call.1} parent=1 // pred_check
      _
    $region31: #{tpu_custom_call.1} parent=1 // pred_check_branch
      %40 = sbr.rel (0) target = $region33
    $region32: #{tpu_custom_call.1} parent=1 // pred_region
      %41 = dma.done [#allocation4], 4096
    $region33: #{tpu_custom_call.1} parent=1 // pred_fallthru
      _
    %v43 = vld [vmem:[%s0] sm:$0xff]
    %v44 = vpack.c.bf16 %v43, %v43
    %v45 = vld [vmem:[%s1] sm:$0xff]
    %v46 = vpack.c.bf16 %v45, %v45
    %v47 = vld [vmem:[%s5] sm:$0x77]
    %v48 = vld [vmem:[%s2] sm:$0xff]
    %v49 = vld [vmem:[%s3] sm:$0xf]
    %v52 = vunpack.c.l.s4 1983009808
    %v53 = vunpack.c.0.s8 %v52
    %v54 = vlaneseq
    %v55 = vshrl.u32 %v54, 7
    %v56 = vsub.s32 %v53, %v55
    %v57 = vrot.slane %v49, %v56
    %v58 = vcombine.high %v57, %v57
    %vm59 = vcmask 31744
    %v61 = vsel %vm59, %v46, 0
    %vm63 = vcmask 1041408
    %v65 = vsel %vm63, %v57, 0
    %v68 = vsel %vm63, %v58, 0
    %70 = vmatprep.subr.bf16.mxu0 %v68
    %71 = vmatpush1.bf16.msra.mxu0 %v65
    %72 = vmatprep.subr.bf16.mxu0 0
    %73 = vmatpush1.bf16.msra.mxu0 0
    %74 = vmatprep.subr.bf16.mxu0 0
    %75 = vmatpush1.bf16.msra.mxu0 0
    %76 = vmatprep.subr.bf16.mxu0 0
    %77 = vmatpush1.bf16.msra.mxu0 0
    %78 = vmatprep.subr.bf16.mxu0 0
    %79 = vmatpush1.bf16.msra.mxu0 0
    %80 = vmatprep.subr.bf16.mxu0 0
    %81 = vmatpush1.bf16.msra.mxu0 0
    %82 = vmatprep.subr.bf16.mxu0 0
    %83 = vmatpush1.bf16.msra.mxu0 0
    %84 = vmatprep.subr.bf16.mxu0 0
    %85 = vmatpush1.bf16.msra.mxu0 0
    %86 = vmatprep.subr.bf16.mxu0 0
    %87 = vmatpush1.bf16.msra.mxu0 0
    %88 = vmatprep.subr.bf16.mxu0 0
    %89 = vmatpush1.bf16.msra.mxu0 0
    %90 = vmatprep.subr.bf16.mxu0 0
    %91 = vmatpush1.bf16.msra.mxu0 0
    %92 = vmatprep.subr.bf16.mxu0 0
    %93 = vmatpush1.bf16.msra.mxu0 0
    %94 = vmatprep.subr.bf16.mxu0 0
    %95 = vmatpush1.bf16.msra.mxu0 0
    %96 = vmatprep.subr.bf16.mxu0 0
    %97 = vmatpush1.bf16.msra.mxu0 0
    %98 = vmatprep.subr.bf16.mxu0 0
    %99 = vmatpush1.bf16.msra.mxu0 0
    %100 = vmatprep.subr.bf16.mxu0 0
    %101 = vmatpush1.bf16.msra.mxu0 0
    %102 = vmatprep.mubr.bf16.mxu0 0
    %103 = vmatmul.mubr.bf16.gmra.mrb[0].mxu0 %v61
    %v104 = vpop.f32.mrb[0].mxu0
    %v105 = vadd.f32 0.0, %v104
    %v106 = vpop.f32.mrb[0].mxu0
    %v107 = vadd.f32 0.0, %v106
    %v108 = vpop.f32.mrb[0].mxu0
    %v109 = vpop.f32.mrb[0].mxu0
    %110 = vdwg.mxu0
    %v112 = vunpack.c.l.b16 %v48
    %v113 = vunpack.c.h.b16 %v48
    %v114 = vpack.c.b16 %v112, %v112
    %v115 = vpack.c.b16 %v113, %v113
    %vm116 = vcmask 64512
    %v118 = vsel %vm116, %v44, 0
    %vm120 = vcmask 1043456
    %v122 = vsel %vm120, %v114, 0
    %v125 = vsel %vm120, %v115, 0
    %127 = vmatprep.subr.bf16.mxu0 %v125
    %128 = vmatpush1.bf16.msra.mxu0 %v122
    %129 = vmatprep.subr.bf16.mxu0 0
    %130 = vmatpush1.bf16.msra.mxu0 0
    %131 = vmatprep.subr.bf16.mxu0 0
    %132 = vmatpush1.bf16.msra.mxu0 0
    %133 = vmatprep.subr.bf16.mxu0 0
    %134 = vmatpush1.bf16.msra.mxu0 0
    %135 = vmatprep.subr.bf16.mxu0 0
    %136 = vmatpush1.bf16.msra.mxu0 0
    %137 = vmatprep.subr.bf16.mxu0 0
    %138 = vmatpush1.bf16.msra.mxu0 0
    %139 = vmatprep.subr.bf16.mxu0 0
    %140 = vmatpush1.bf16.msra.mxu0 0
    %141 = vmatprep.subr.bf16.mxu0 0
    %142 = vmatpush1.bf16.msra.mxu0 0
    %143 = vmatprep.subr.bf16.mxu0 0
    %144 = vmatpush1.bf16.msra.mxu0 0
    %145 = vmatprep.subr.bf16.mxu0 0
    %146 = vmatpush1.bf16.msra.mxu0 0
    %147 = vmatprep.subr.bf16.mxu0 0
    %148 = vmatpush1.bf16.msra.mxu0 0
    %149 = vmatprep.subr.bf16.mxu0 0
    %150 = vmatpush1.bf16.msra.mxu0 0
    %151 = vmatprep.subr.bf16.mxu0 0
    %152 = vmatpush1.bf16.msra.mxu0 0
    %153 = vmatprep.subr.bf16.mxu0 0
    %154 = vmatpush1.bf16.msra.mxu0 0
    %155 = vmatprep.subr.bf16.mxu0 0
    %156 = vmatpush1.bf16.msra.mxu0 0
    %157 = vmatprep.subr.bf16.mxu0 0
    %158 = vmatpush1.bf16.msra.mxu0 0
    %159 = vmatprep.mubr.bf16.mxu0 0
    %160 = vmatmul.mubr.bf16.gmra.mrb[0].mxu0 %v118
    %v161 = vpop.f32.mrb[0].mxu0
    %v162 = vadd.f32 %v105, %v161
    %v163 = vpop.f32.mrb[0].mxu0
    %v164 = vadd.f32 %v107, %v163
    %v165 = vpop.f32.mrb[0].mxu0
    %v166 = vpop.f32.mrb[0].mxu0
    %167 = vdwg.mxu0
    %v169 = vlaneseq
    %v170 = vshrl.u32 %v169, 7
    %v171 = vsub.s32 0, %v170
    %v172 = vrot.slane %v47, %v171
    %v173 = vlaneseq
    %v174 = vshrl.u32 %v173, 7
    %v175 = vsub.s32 4, %v174
    %v176 = vrot.slane %v47, %v175
    %v179 = vlaneseq
    %v180 = vshrl.u32 %v179, 7
    %v181 = vsub.s32 0, %v180
    %v182 = vrot.slane %v172, %v181
    %v183 = vlaneseq
    %v184 = vshrl.u32 %v183, 7
    %v185 = vsub.s32 0, %v184
    %v186 = vrot.slane %v176, %v185
    %v187 = vadd.f32 %v162, %v182
    %v188 = vadd.f32 %v164, %v186
    %v189 = vmax.f32 %v187, 0.0
    %v190 = vmax.f32 %v188, 0.0
    %v191 = vpack.c.bf16 %v189, %v189
    %v192 = vpack.c.bf16 %v190, %v190
    %v193 = vld [vmem:[#allocation3] sm:$0xff]
    %v194 = vld [vmem:[#allocation3 + $0x8] sm:$0xff]
    %v195 = vld [vmem:[#allocation3 + $0x10] sm:$0xff]
    %v196 = vld [vmem:[#allocation3 + $0x18] sm:$0xff]
    %v197 = vld [vmem:[#allocation3 + $0x20] sm:$0xff]
    %v198 = vld [vmem:[#allocation3 + $0x28] sm:$0xff]
    %v199 = vld [vmem:[#allocation3 + $0x30] sm:$0xff]
    %v200 = vld [vmem:[#allocation3 + $0x38] sm:$0xff]
    %v201 = vld [vmem:[#allocation3 + $0x40] sm:$0xff]
    %v202 = vld [vmem:[#allocation3 + $0x48] sm:$0xff]
    %v203 = vld [vmem:[#allocation3 + $0x50] sm:$0xff]
    %v204 = vld [vmem:[#allocation3 + $0x58] sm:$0xff]
    %v205 = vld [vmem:[#allocation3 + $0x60] sm:$0xff]
    %v206 = vld [vmem:[#allocation3 + $0x68] sm:$0xff]
    %v207 = vld [vmem:[#allocation3 + $0x70] sm:$0xff]
    %v208 = vld [vmem:[#allocation3 + $0x78] sm:$0xff]
    %v209 = vld [vmem:[#allocation3 + $0x80] sm:$0xff]
    %v210 = vld [vmem:[#allocation3 + $0x88] sm:$0xff]
    %v211 = vld [vmem:[#allocation3 + $0x90] sm:$0xff]
    %v212 = vld [vmem:[#allocation3 + $0x98] sm:$0xff]
    %v213 = vld [vmem:[#allocation3 + $0xa0] sm:$0xff]
    %v214 = vld [vmem:[#allocation3 + $0xa8] sm:$0xff]
    %v215 = vld [vmem:[#allocation3 + $0xb0] sm:$0xff]
    %v216 = vld [vmem:[#allocation3 + $0xb8] sm:$0xff]
    %v217 = vld [vmem:[#allocation3 + $0xc0] sm:$0xff]
    %v218 = vld [vmem:[#allocation3 + $0xc8] sm:$0xff]
    %v219 = vld [vmem:[#allocation3 + $0xd0] sm:$0xff]
    %v220 = vld [vmem:[#allocation3 + $0xd8] sm:$0xff]
    %v221 = vld [vmem:[#allocation3 + $0xe0] sm:$0xff]
    %v222 = vld [vmem:[#allocation3 + $0xe8] sm:$0xff]
    %v223 = vld [vmem:[#allocation3 + $0xf0] sm:$0xff]
    %v224 = vld [vmem:[#allocation3 + $0xf8] sm:$0xff]
    %v225 = vlaneseq
    %v226 = vshrl.u32 %v225, 7
    %v227 = vsub.s32 1, %v226
    %v228 = vrot.slane %v47, %v227
    %v229 = vlaneseq
    %v230 = vshrl.u32 %v229, 7
    %v231 = vsub.s32 5, %v230
    %v232 = vrot.slane %v47, %v231
    %v235 = vlaneseq
    %v236 = vshrl.u32 %v235, 7
    %v237 = vsub.s32 1, %v236
    %v238 = vrot.slane %v228, %v237
    %v239 = vlaneseq
    %v240 = vshrl.u32 %v239, 7
    %v241 = vsub.s32 1, %v240
    %v242 = vrot.slane %v232, %v241
    %v275 = vunpack.c.l.b16 %v193
    %v276 = vunpack.c.h.b16 %v193
    %v277 = vunpack.c.l.b16 %v194
    %v278 = vunpack.c.h.b16 %v194
    %v279 = vunpack.c.l.b16 %v195
    %v280 = vunpack.c.h.b16 %v195
    %v281 = vunpack.c.l.b16 %v196
    %v282 = vunpack.c.h.b16 %v196
    %v283 = vunpack.c.l.b16 %v197
    %v284 = vunpack.c.h.b16 %v197
    %v285 = vunpack.c.l.b16 %v198
    %v286 = vunpack.c.h.b16 %v198
    %v287 = vunpack.c.l.b16 %v199
    %v288 = vunpack.c.h.b16 %v199
    %v289 = vunpack.c.l.b16 %v200
    %v290 = vunpack.c.h.b16 %v200
    %v291 = vunpack.c.l.b16 %v201
    %v292 = vunpack.c.h.b16 %v201
    %v293 = vunpack.c.l.b16 %v202
    %v294 = vunpack.c.h.b16 %v202
    %v295 = vunpack.c.l.b16 %v203
    %v296 = vunpack.c.h.b16 %v203
    %v297 = vunpack.c.l.b16 %v204
    %v298 = vunpack.c.h.b16 %v204
    %v299 = vunpack.c.l.b16 %v205
    %v300 = vunpack.c.h.b16 %v205
    %v301 = vunpack.c.l.b16 %v206
    %v302 = vunpack.c.h.b16 %v206
    %v303 = vunpack.c.l.b16 %v207
    %v304 = vunpack.c.h.b16 %v207
    %v305 = vunpack.c.l.b16 %v208
    %v306 = vunpack.c.h.b16 %v208
    %v307 = vunpack.c.l.b16 %v209
    %v308 = vunpack.c.h.b16 %v209
    %v309 = vunpack.c.l.b16 %v210
    %v310 = vunpack.c.h.b16 %v210
    %v311 = vunpack.c.l.b16 %v211
    %v312 = vunpack.c.h.b16 %v211
    %v313 = vunpack.c.l.b16 %v212
    %v314 = vunpack.c.h.b16 %v212
    %v315 = vunpack.c.l.b16 %v213
    %v316 = vunpack.c.h.b16 %v213
    %v317 = vunpack.c.l.b16 %v214
    %v318 = vunpack.c.h.b16 %v214
    %v319 = vunpack.c.l.b16 %v215
    %v320 = vunpack.c.h.b16 %v215
    %v321 = vunpack.c.l.b16 %v216
    %v322 = vunpack.c.h.b16 %v216
    %v323 = vunpack.c.l.b16 %v217
    %v324 = vunpack.c.h.b16 %v217
    %v325 = vunpack.c.l.b16 %v218
    %v326 = vunpack.c.h.b16 %v218
    %v327 = vunpack.c.l.b16 %v219
    %v328 = vunpack.c.h.b16 %v219
    %v329 = vunpack.c.l.b16 %v220
    %v330 = vunpack.c.h.b16 %v220
    %v331 = vunpack.c.l.b16 %v221
    %v332 = vunpack.c.h.b16 %v221
    %v333 = vunpack.c.l.b16 %v222
    %v334 = vunpack.c.h.b16 %v222
    %v335 = vunpack.c.l.b16 %v223
    %v336 = vunpack.c.h.b16 %v223
    %v337 = vunpack.c.l.b16 %v224
    %v338 = vunpack.c.h.b16 %v224
    %v339 = vpack.c.b16 %v277, %v275
    %v340 = vpack.c.b16 %v278, %v276
    %v341 = vpack.c.b16 %v281, %v279
    %v342 = vpack.c.b16 %v282, %v280
    %v343 = vpack.c.b16 %v285, %v283
    %v344 = vpack.c.b16 %v286, %v284
    %v345 = vpack.c.b16 %v289, %v287
    %v346 = vpack.c.b16 %v290, %v288
    %v347 = vpack.c.b16 %v293, %v291
    %v348 = vpack.c.b16 %v294, %v292
    %v349 = vpack.c.b16 %v297, %v295
    %v350 = vpack.c.b16 %v298, %v296
    %v351 = vpack.c.b16 %v301, %v299
    %v352 = vpack.c.b16 %v302, %v300
    %v353 = vpack.c.b16 %v305, %v303
    %v354 = vpack.c.b16 %v306, %v304
    %v355 = vpack.c.b16 %v309, %v307
    %v356 = vpack.c.b16 %v310, %v308
    %v357 = vpack.c.b16 %v313, %v311
    %v358 = vpack.c.b16 %v314, %v312
    %v359 = vpack.c.b16 %v317, %v315
    %v360 = vpack.c.b16 %v318, %v316
    %v361 = vpack.c.b16 %v321, %v319
    %v362 = vpack.c.b16 %v322, %v320
    %v363 = vpack.c.b16 %v325, %v323
    %v364 = vpack.c.b16 %v326, %v324
    %v365 = vpack.c.b16 %v329, %v327
    %v366 = vpack.c.b16 %v330, %v328
    %v367 = vpack.c.b16 %v333, %v331
    %v368 = vpack.c.b16 %v334, %v332
    %v369 = vpack.c.b16 %v337, %v335
    %v370 = vpack.c.b16 %v338, %v336
    %403 = vmatprep.subr.bf16.mxu0 %v340
    %404 = vmatpush1.bf16.msra.mxu0 %v339
    %405 = vmatprep.subr.bf16.mxu0 %v342
    %406 = vmatpush1.bf16.msra.mxu0 %v341
    %407 = vmatprep.subr.bf16.mxu0 %v344
    %408 = vmatpush1.bf16.msra.mxu0 %v343
    %409 = vmatprep.subr.bf16.mxu0 %v346
    %410 = vmatpush1.bf16.msra.mxu0 %v345
    %411 = vmatprep.subr.bf16.mxu0 %v348
    %412 = vmatpush1.bf16.msra.mxu0 %v347
    %413 = vmatprep.subr.bf16.mxu0 %v350
    %414 = vmatpush1.bf16.msra.mxu0 %v349
    %415 = vmatprep.subr.bf16.mxu0 %v352
    %416 = vmatpush1.bf16.msra.mxu0 %v351
    %417 = vmatprep.subr.bf16.mxu0 %v354
    %418 = vmatpush1.bf16.msra.mxu0 %v353
    %419 = vmatprep.subr.bf16.mxu0 %v356
    %420 = vmatpush1.bf16.msra.mxu0 %v355
    %421 = vmatprep.subr.bf16.mxu0 %v358
    %422 = vmatpush1.bf16.msra.mxu0 %v357
    %423 = vmatprep.subr.bf16.mxu0 %v360
    %424 = vmatpush1.bf16.msra.mxu0 %v359
    %425 = vmatprep.subr.bf16.mxu0 %v362
    %426 = vmatpush1.bf16.msra.mxu0 %v361
    %427 = vmatprep.subr.bf16.mxu0 %v364
    %428 = vmatpush1.bf16.msra.mxu0 %v363
    %429 = vmatprep.subr.bf16.mxu0 %v366
    %430 = vmatpush1.bf16.msra.mxu0 %v365
    %431 = vmatprep.subr.bf16.mxu0 %v368
    %432 = vmatpush1.bf16.msra.mxu0 %v367
    %433 = vmatprep.subr.bf16.mxu0 %v370
    %434 = vmatpush1.bf16.msra.mxu0 %v369
    %435 = vmatprep.mubr.bf16.mxu0 %v192
    %436 = vmatmul.mubr.bf16.gmra.mrb[0].mxu0 %v191
    %v437 = vpop.f32.mrb[0].mxu0
    %v438 = vadd.f32 %v238, %v437
    %v439 = vpop.f32.mrb[0].mxu0
    %v440 = vadd.f32 %v242, %v439
    %v441 = vpop.f32.mrb[0].mxu0
    %v442 = vpop.f32.mrb[0].mxu0
    %443 = vdwg.mxu0
    %v444 = vmax.f32 %v438, 0.0
    %v445 = vmax.f32 %v440, 0.0
    %v446 = vlaneseq
    %v447 = vshrl.u32 %v446, 7
    %v448 = vsub.s32 2, %v447
    %v449 = vrot.slane %v47, %v448
    %v450 = vlaneseq
    %v451 = vshrl.u32 %v450, 7
    %v452 = vsub.s32 6, %v451
    %v453 = vrot.slane %v47, %v452
    %v456 = vlaneseq
    %v457 = vshrl.u32 %v456, 7
    %v458 = vsub.s32 2, %v457
    %v459 = vrot.slane %v449, %v458
    %v460 = vlaneseq
    %v461 = vshrl.u32 %v460, 7
    %v462 = vsub.s32 2, %v461
    %v463 = vrot.slane %v453, %v462
    %v464 = vmul.f32 %v444, %v459
    %v465 = vmul.f32 %v445, %v463
    %v466 = vadd.f32 %v464, %v465
    %467 = vadd.xlane.f32.xlu0 %v466
    %v468 = vpop.xlane.xlu0 %467
    %s469 = sld [smem:[#allocation2]]
    %v470 = vstv %s469
    %v471 = vadd.f32 %v468, %v470
    %v473 = vlaneseq
    %v474 = vand.u32 %v473, 127
    %v475 = vlaneseq
    %v476 = vshrl.u32 %v475, 7
    %v477 = vsub.s32 %v474, %v476
    %v478 = vrot.slane %v471, %v477
    %vm480 = vcmask 57344
    %481 = vst.msk [vmem:[#allocation6] sm:$0x1] %vm480, %v478
    // Predicated region
    $region34: #{tpu_custom_call.1} parent=1 // pred_check
      _
    $region35: #{tpu_custom_call.1} parent=1 // pred_check_branch
      %483 = sbr.rel (0) target = $region37
    $region36: #{tpu_custom_call.1} parent=1 // pred_region
      %s485 = ssub.s32 16, 16
      %486 = vsyncadd [#allocation5], %s485
      %s488 = sshll.u32 [#allocation6], 4
      %s489 = int_to_ptr.vmem [resolvable:$true] %s488
      %491 = dma.vmem_to_hbm [thread:$0]  %s489, 16, %s7, [#allocation5]
    $region37: #{tpu_custom_call.1} parent=1 // pred_fallthru
      _
    // Predicated region
    $region38: #{tpu_custom_call.1} parent=1 // pred_check
      _
    $region39: #{tpu_custom_call.1} parent=1 // pred_check_branch
      %493 = sbr.rel (0) target = $region41
    $region40: #{tpu_custom_call.1} parent=1 // pred_region
      %494 = dma.done [#allocation5], 16
    $region41: #{tpu_custom_call.1} parent=1 // pred_fallthru
      _
    %495 = vsyncpa [#allocation4], 1
    %496 = vsyncpa [#allocation5], 1

</llo_original>
